<compile_context>
chip_gen: v5e
topology: v5e:2x2
jax: 0.10.0
libtpu: 0.0.40
codegen_flags: <defaults>
</compile_context>

<pallas_src>
import numpy as np
import jax
import jax.numpy as jnp
from jax.experimental import pallas as pl
from jax.experimental.pallas import tpu as pltpu

# ----------------------- model hyper-parameters (small) ----------------------
INPUT_DIM = 32
INT_DIM = 64
OUTPUT_DIM = 16
N_BLOCKS = 3
NUM_EMB_B = 8
NUM_EMB_S = 6
NUM_EMB_W = 10
EMB_DIM_B = 16
EMB_DIM_S = 16
EMB_DIM_SB = EMB_DIM_S + EMB_DIM_B          # width of concat(it_s, it_b) = 32
K_DV = INT_DIM + EMB_DIM_SB                 # dv_layer input width = 96
BN_EPS = 1e-5

BATCH = 16

HEAD_WIDTHS = (OUTPUT_DIM, NUM_EMB_B, NUM_EMB_S, NUM_EMB_W)   # 16, 8, 6, 10
HEAD_TOTAL = sum(HEAD_WIDTHS)                                 # 40
HEAD_PAD = 128                    # lane-dense output slab width

# Packed bias rows: 0 = fused embedding tails, 1 = proj,
#                   2..4 = s_layers, 5..7 = dv_layers, 8 = fused heads.
BIAS_ROWS = 9


def _gelu(x):
    # exact (erf-based) GELU -- matches torch.nn.GELU() default
    return 0.5 * x * (1.0 + jax.lax.erf(x * np.float32(0.7071067811865476)))


# --------------------------------- kernel ------------------------------------
def mmd_resnet_kernel(dv_ref, ec_ref, wsq_ref, wdv_ref, wh_ref, b_ref, out_ref):
    # proj: Linear(input_dim, int_dim) + BN (folded), no activation.
    y = (jnp.dot(dv_ref[...], wdv_ref[0, :INPUT_DIM, :],
                 preferred_element_type=jnp.float32)
         + b_ref[1:2, :INT_DIM])

    # embedding_s / embedding_b tails (Linear + BN + GELU on each, then concat)
    # fused into a single block-diagonal matmul on concat(emb_s, emb_b).
    it = _gelu(jnp.dot(ec_ref[...], wsq_ref[0],
                       preferred_element_type=jnp.float32)
               + b_ref[0:1, :EMB_DIM_SB])

    for l in range(N_BLOCKS):
        # s_layers[l]: Linear(32, 32) + BN + GELU.
        it = _gelu(jnp.dot(it, wsq_ref[l + 1],
                           preferred_element_type=jnp.float32)
                   + b_ref[2 + l:3 + l, :EMB_DIM_SB])

        # dv_layers[l]: Linear(96, 64) + BN + Dropout(eval=id) + GELU on
        # concat(y, it) -- one K=96 matmul (lane concat is an XLU op).
        cat = jnp.concatenate([y, it], axis=-1)           # [N, 96]
        h = _gelu(jnp.dot(cat, wdv_ref[l + 1],
                          preferred_element_type=jnp.float32)
                  + b_ref[5 + l:6 + l, :INT_DIM])
        y = h + y if (l % 2) else h                       # residual on odd blocks

    # Fused heads: final / b / s / w packed into a single [64, 128] weight
    # -> one MXU matmul and one unmasked lane-dense store.
    out_ref[...] = (jnp.dot(y, wh_ref[...], preferred_element_type=jnp.float32)
                    + b_ref[8:9, :])


# ------------------------------ parameter init --------------------------------
def init_params(key):
    keys = iter(jax.random.split(key, 128))

    def lin(in_d, out_d):
        lim = 1.0 / np.sqrt(in_d)
        w = jax.random.uniform(next(keys), (in_d, out_d), jnp.float32, -lim, lim)
        b = jax.random.uniform(next(keys), (out_d,), jnp.float32, -lim, lim)
        return w, b

    def bn(d):
        g = jax.random.uniform(next(keys), (d,), jnp.float32, 0.5, 1.5)
        beta = 0.1 * jax.random.normal(next(keys), (d,), jnp.float32)
        mean = 0.1 * jax.random.normal(next(keys), (d,), jnp.float32)
        var = jax.random.uniform(next(keys), (d,), jnp.float32, 0.5, 1.5)
        return g, beta, mean, var

    def fold(w, b, g, beta, mean, var):
        # eval-mode BatchNorm1d folded into the preceding Linear
        s = g / jnp.sqrt(var + BN_EPS)
        return w * s[None, :], (b - mean) * s + beta

    p = {}
    p["emb_table_s"] = 0.5 * jax.random.normal(next(keys), (NUM_EMB_S, EMB_DIM_S), jnp.float32)
    p["emb_table_b"] = 0.5 * jax.random.normal(next(keys), (NUM_EMB_B, EMB_DIM_B), jnp.float32)

    ws, bs = fold(*lin(EMB_DIM_S, EMB_DIM_S), *bn(EMB_DIM_S))
    wb, bb = fold(*lin(EMB_DIM_B, EMB_DIM_B), *bn(EMB_DIM_B))
    wp, bp = fold(*lin(INPUT_DIM, INT_DIM), *bn(INT_DIM))

    sW, sb, dW, db = [], [], [], []
    for _ in range(N_BLOCKS):
        w, b = fold(*lin(EMB_DIM_SB, EMB_DIM_SB), *bn(EMB_DIM_SB))
        sW.append(w); sb.append(b)
        w, b = fold(*lin(K_DV, INT_DIM), *bn(INT_DIM))
        dW.append(w); db.append(b)

    wf, bf = lin(INT_DIM, OUTPUT_DIM)
    wbh, bbh = lin(INT_DIM, NUM_EMB_B)
    wsh, bsh = lin(INT_DIM, NUM_EMB_S)
    wwh, bwh = lin(INT_DIM, NUM_EMB_W)

    # ------------------------------ packing -----------------------------------
    # W_sq [4, 32, 32]: [0] = block_diag(ws, wb) (fused embedding tails),
    #                   [1..3] = s_layers.
    w_ec = jnp.zeros((EMB_DIM_SB, EMB_DIM_SB), jnp.float32)
    w_ec = w_ec.at[:EMB_DIM_S, :EMB_DIM_S].set(ws)
    w_ec = w_ec.at[EMB_DIM_S:, EMB_DIM_S:].set(wb)
    p["W_sq"] = jnp.stack([w_ec] + sW)

    # W_dv [4, 96, 64]: [0, :32, :] = proj (rest zero-padded), [1..3] = dv_layers.
    wp_pad = jnp.zeros((K_DV, INT_DIM), jnp.float32).at[:INPUT_DIM, :].set(wp)
    p["W_dv"] = jnp.stack([wp_pad] + dW)

    # W_head [64, 128]: final | b | s | w side by side, zero-padded to 128 lanes.
    w_head = jnp.zeros((INT_DIM, HEAD_PAD), jnp.float32)
    off = 0
    for w in (wf, wbh, wsh, wwh):
        w_head = w_head.at[:, off:off + w.shape[1]].set(w)
        off += w.shape[1]
    p["W_head"] = w_head

    # All biases packed into one [9, 128] array (zero-padded lanes).
    b_all = jnp.zeros((BIAS_ROWS, HEAD_PAD), jnp.float32)
    b_all = b_all.at[0, :EMB_DIM_SB].set(jnp.concatenate([bs, bb]))
    b_all = b_all.at[1, :INT_DIM].set(bp)
    for l in range(N_BLOCKS):
        b_all = b_all.at[2 + l, :EMB_DIM_SB].set(sb[l])
        b_all = b_all.at[5 + l, :INT_DIM].set(db[l])
    b_all = b_all.at[8, :HEAD_TOTAL].set(jnp.concatenate([bf, bbh, bsh, bwh]))
    p["biases"] = b_all
    return p


# --------------------------------- wrapper ------------------------------------
def run_forward(params, dv, iv_s, iv_b, iv_w):
    del iv_w  # iv_w is an argument of Mmd_resnet.forward but is never used

    # nn.Embedding lookups (gathers) done as plain-JAX glue, pre-concatenated.
    es = params["emb_table_s"][iv_s]                      # [N, EMB_DIM_S]
    eb = params["emb_table_b"][iv_b]                      # [N, EMB_DIM_B]
    ec = jnp.concatenate([es, eb], axis=-1)               # [N, 32]

    n = dv.shape[0]

    # Single invocation, whole arrays resident in VMEM (~250 KB total).
    # TODO(synk): for batches >> 16 on v7x, reintroduce a parallel grid
    # (TILE_N ~ 256, dimension_semantics=("parallel",)) so both TensorCores
    # get work, and cast weights/activations to bf16 on v6e/v7x.
    vmem = pl.BlockSpec(memory_space=pltpu.MemorySpace.VMEM)
    slab = pl.pallas_call(
        mmd_resnet_kernel,
        out_shape=jax.ShapeDtypeStruct((n, HEAD_PAD), jnp.float32),
        in_specs=[vmem] * 6,
        out_specs=vmem,
    )(dv, ec, params["W_sq"], params["W_dv"], params["W_head"], params["biases"])

    o0 = OUTPUT_DIM
    o1 = o0 + NUM_EMB_B
    o2 = o1 + NUM_EMB_S
    o3 = o2 + NUM_EMB_W
    out = slab[:, :o0]
    b_head = slab[:, o0:o1]
    s_head = slab[:, o1:o2]
    w_head = slab[:, o2:o3]
    return out, b_head, s_head, w_head


# ----------------------------------- main --------------------------------------
if __name__ == "__main__":
    key = jax.random.PRNGKey(0)
    kp, kd, ks, kb, kw = jax.random.split(key, 5)

    params = init_params(kp)
    dv = jax.random.normal(kd, (BATCH, INPUT_DIM), jnp.float32)
    iv_s = jax.random.randint(ks, (BATCH,), 0, NUM_EMB_S)
    iv_b = jax.random.randint(kb, (BATCH,), 0, NUM_EMB_B)
    iv_w = jax.random.randint(kw, (BATCH,), 0, NUM_EMB_W)

    out, b_head, s_head, w_head = run_forward(params, dv, iv_s, iv_b, iv_w)
    jax.block_until_ready((out, b_head, s_head, w_head))
    assert out.shape == (BATCH, OUTPUT_DIM)
    assert b_head.shape == (BATCH, NUM_EMB_B)
    assert s_head.shape == (BATCH, NUM_EMB_S)
    assert w_head.shape == (BATCH, NUM_EMB_W)
    print("KERNEL_OK")
</pallas_src>

<mosaic_0001>
module attributes {stable_mosaic.version = 11 : i64} {
  func.func @mmd_resnet_kernel(%arg0: memref<16x32xf32, #tpu.memory_space<vmem>>, %arg1: memref<16x32xf32, #tpu.memory_space<vmem>>, %arg2: memref<4x32x32xf32, #tpu.memory_space<vmem>>, %arg3: memref<4x96x64xf32, #tpu.memory_space<vmem>>, %arg4: memref<64x128xf32, #tpu.memory_space<vmem>>, %arg5: memref<9x128xf32, #tpu.memory_space<vmem>>, %arg6: memref<16x128xf32, #tpu.memory_space<vmem>>) attributes {dimension_semantics = [], scalar_prefetch = 0 : i64, scratch_operands = 0 : i64, tpu.core_type = #tpu.core_type<tc>} {
    %c0 = arith.constant 0 : index
    %c0_0 = arith.constant 0 : index
    %0 = vector.load %arg0[%c0, %c0_0] : memref<16x32xf32, #tpu.memory_space<vmem>>, vector<16x32xf32>
    %c0_1 = arith.constant 0 : index
    %c0_2 = arith.constant 0 : index
    %c0_3 = arith.constant 0 : index
    %1 = vector.load %arg3[%c0_1, %c0_2, %c0_3] : memref<4x96x64xf32, #tpu.memory_space<vmem>>, vector<1x32x64xf32>
    %2 = vector.shape_cast %1 : vector<1x32x64xf32> to vector<32x64xf32>
    %cst = arith.constant dense<0.000000e+00> : vector<16x64xf32>
    %3 = tpu.matmul %0, %2, %cst {dimension_numbers = #tpu.dot_dimension_numbers<[1], [0], [0], [1], [0, 0, 1, 1], [], []>} : vector<16x32xf32>, vector<32x64xf32>, vector<16x64xf32> -> vector<16x64xf32>
    %c1 = arith.constant 1 : index
    %c0_4 = arith.constant 0 : index
    %4 = vector.load %arg5[%c1, %c0_4] : memref<9x128xf32, #tpu.memory_space<vmem>>, vector<1x64xf32>
    %5 = vector.broadcast %4 : vector<1x64xf32> to vector<16x64xf32>
    %6 = arith.addf %3, %5 : vector<16x64xf32>
    %c0_5 = arith.constant 0 : index
    %c0_6 = arith.constant 0 : index
    %7 = vector.load %arg1[%c0_5, %c0_6] : memref<16x32xf32, #tpu.memory_space<vmem>>, vector<16x32xf32>
    %c0_7 = arith.constant 0 : index
    %c0_8 = arith.constant 0 : index
    %c0_9 = arith.constant 0 : index
    %8 = vector.load %arg2[%c0_7, %c0_8, %c0_9] : memref<4x32x32xf32, #tpu.memory_space<vmem>>, vector<1x32x32xf32>
    %9 = vector.shape_cast %8 : vector<1x32x32xf32> to vector<32x32xf32>
    %cst_10 = arith.constant dense<0.000000e+00> : vector<16x32xf32>
    %10 = tpu.matmul %7, %9, %cst_10 {dimension_numbers = #tpu.dot_dimension_numbers<[1], [0], [0], [1], [0, 0, 1, 1], [], []>} : vector<16x32xf32>, vector<32x32xf32>, vector<16x32xf32> -> vector<16x32xf32>
    %c0_11 = arith.constant 0 : index
    %c0_12 = arith.constant 0 : index
    %11 = vector.load %arg5[%c0_11, %c0_12] : memref<9x128xf32, #tpu.memory_space<vmem>>, vector<1x32xf32>
    %12 = vector.broadcast %11 : vector<1x32xf32> to vector<16x32xf32>
    %13 = arith.addf %10, %12 : vector<16x32xf32>
    %cst_13 = arith.constant 5.000000e-01 : f32
    %14 = vector.broadcast %cst_13 : f32 to vector<16x32xf32>
    %15 = arith.mulf %14, %13 : vector<16x32xf32>
    %cst_14 = arith.constant 0.707106769 : f32
    %16 = vector.broadcast %cst_14 : f32 to vector<16x32xf32>
    %17 = arith.mulf %13, %16 : vector<16x32xf32>
    %18 = math.erf %17 : vector<16x32xf32>
    %cst_15 = arith.constant 1.000000e+00 : f32
    %19 = vector.broadcast %cst_15 : f32 to vector<16x32xf32>
    %20 = arith.addf %19, %18 : vector<16x32xf32>
    %21 = arith.mulf %15, %20 : vector<16x32xf32>
    %c1_16 = arith.constant 1 : index
    %c0_17 = arith.constant 0 : index
    %c0_18 = arith.constant 0 : index
    %22 = vector.load %arg2[%c1_16, %c0_17, %c0_18] : memref<4x32x32xf32, #tpu.memory_space<vmem>>, vector<1x32x32xf32>
    %23 = vector.shape_cast %22 : vector<1x32x32xf32> to vector<32x32xf32>
    %cst_19 = arith.constant dense<0.000000e+00> : vector<16x32xf32>
    %24 = tpu.matmul %21, %23, %cst_19 {dimension_numbers = #tpu.dot_dimension_numbers<[1], [0], [0], [1], [0, 0, 1, 1], [], []>} : vector<16x32xf32>, vector<32x32xf32>, vector<16x32xf32> -> vector<16x32xf32>
    %c2 = arith.constant 2 : index
    %c0_20 = arith.constant 0 : index
    %25 = vector.load %arg5[%c2, %c0_20] : memref<9x128xf32, #tpu.memory_space<vmem>>, vector<1x32xf32>
    %26 = vector.broadcast %25 : vector<1x32xf32> to vector<16x32xf32>
    %27 = arith.addf %24, %26 : vector<16x32xf32>
    %cst_21 = arith.constant 5.000000e-01 : f32
    %28 = vector.broadcast %cst_21 : f32 to vector<16x32xf32>
    %29 = arith.mulf %28, %27 : vector<16x32xf32>
    %cst_22 = arith.constant 0.707106769 : f32
    %30 = vector.broadcast %cst_22 : f32 to vector<16x32xf32>
    %31 = arith.mulf %27, %30 : vector<16x32xf32>
    %32 = math.erf %31 : vector<16x32xf32>
    %cst_23 = arith.constant 1.000000e+00 : f32
    %33 = vector.broadcast %cst_23 : f32 to vector<16x32xf32>
    %34 = arith.addf %33, %32 : vector<16x32xf32>
    %35 = arith.mulf %29, %34 : vector<16x32xf32>
    %36 = tpu.concatenate %6, %35 in 1 : vector<16x64xf32>, vector<16x32xf32> -> vector<16x96xf32>
    %c1_24 = arith.constant 1 : index
    %c0_25 = arith.constant 0 : index
    %c0_26 = arith.constant 0 : index
    %37 = vector.load %arg3[%c1_24, %c0_25, %c0_26] : memref<4x96x64xf32, #tpu.memory_space<vmem>>, vector<1x96x64xf32>
    %38 = vector.shape_cast %37 : vector<1x96x64xf32> to vector<96x64xf32>
    %cst_27 = arith.constant dense<0.000000e+00> : vector<16x64xf32>
    %39 = tpu.matmul %36, %38, %cst_27 {dimension_numbers = #tpu.dot_dimension_numbers<[1], [0], [0], [1], [0, 0, 1, 1], [], []>} : vector<16x96xf32>, vector<96x64xf32>, vector<16x64xf32> -> vector<16x64xf32>
    %c5 = arith.constant 5 : index
    %c0_28 = arith.constant 0 : index
    %40 = vector.load %arg5[%c5, %c0_28] : memref<9x128xf32, #tpu.memory_space<vmem>>, vector<1x64xf32>
    %41 = vector.broadcast %40 : vector<1x64xf32> to vector<16x64xf32>
    %42 = arith.addf %39, %41 : vector<16x64xf32>
    %cst_29 = arith.constant 5.000000e-01 : f32
    %43 = vector.broadcast %cst_29 : f32 to vector<16x64xf32>
    %44 = arith.mulf %43, %42 : vector<16x64xf32>
    %cst_30 = arith.constant 0.707106769 : f32
    %45 = vector.broadcast %cst_30 : f32 to vector<16x64xf32>
    %46 = arith.mulf %42, %45 : vector<16x64xf32>
    %47 = math.erf %46 : vector<16x64xf32>
    %cst_31 = arith.constant 1.000000e+00 : f32
    %48 = vector.broadcast %cst_31 : f32 to vector<16x64xf32>
    %49 = arith.addf %48, %47 : vector<16x64xf32>
    %50 = arith.mulf %44, %49 : vector<16x64xf32>
    %c2_32 = arith.constant 2 : index
    %c0_33 = arith.constant 0 : index
    %c0_34 = arith.constant 0 : index
    %51 = vector.load %arg2[%c2_32, %c0_33, %c0_34] : memref<4x32x32xf32, #tpu.memory_space<vmem>>, vector<1x32x32xf32>
    %52 = vector.shape_cast %51 : vector<1x32x32xf32> to vector<32x32xf32>
    %cst_35 = arith.constant dense<0.000000e+00> : vector<16x32xf32>
    %53 = tpu.matmul %35, %52, %cst_35 {dimension_numbers = #tpu.dot_dimension_numbers<[1], [0], [0], [1], [0, 0, 1, 1], [], []>} : vector<16x32xf32>, vector<32x32xf32>, vector<16x32xf32> -> vector<16x32xf32>
    %c3 = arith.constant 3 : index
    %c0_36 = arith.constant 0 : index
    %54 = vector.load %arg5[%c3, %c0_36] : memref<9x128xf32, #tpu.memory_space<vmem>>, vector<1x32xf32>
    %55 = vector.broadcast %54 : vector<1x32xf32> to vector<16x32xf32>
    %56 = arith.addf %53, %55 : vector<16x32xf32>
    %cst_37 = arith.constant 5.000000e-01 : f32
    %57 = vector.broadcast %cst_37 : f32 to vector<16x32xf32>
    %58 = arith.mulf %57, %56 : vector<16x32xf32>
    %cst_38 = arith.constant 0.707106769 : f32
    %59 = vector.broadcast %cst_38 : f32 to vector<16x32xf32>
    %60 = arith.mulf %56, %59 : vector<16x32xf32>
    %61 = math.erf %60 : vector<16x32xf32>
    %cst_39 = arith.constant 1.000000e+00 : f32
    %62 = vector.broadcast %cst_39 : f32 to vector<16x32xf32>
    %63 = arith.addf %62, %61 : vector<16x32xf32>
    %64 = arith.mulf %58, %63 : vector<16x32xf32>
    %65 = tpu.concatenate %50, %64 in 1 : vector<16x64xf32>, vector<16x32xf32> -> vector<16x96xf32>
    %c2_40 = arith.constant 2 : index
    %c0_41 = arith.constant 0 : index
    %c0_42 = arith.constant 0 : index
    %66 = vector.load %arg3[%c2_40, %c0_41, %c0_42] : memref<4x96x64xf32, #tpu.memory_space<vmem>>, vector<1x96x64xf32>
    %67 = vector.shape_cast %66 : vector<1x96x64xf32> to vector<96x64xf32>
    %cst_43 = arith.constant dense<0.000000e+00> : vector<16x64xf32>
    %68 = tpu.matmul %65, %67, %cst_43 {dimension_numbers = #tpu.dot_dimension_numbers<[1], [0], [0], [1], [0, 0, 1, 1], [], []>} : vector<16x96xf32>, vector<96x64xf32>, vector<16x64xf32> -> vector<16x64xf32>
    %c6 = arith.constant 6 : index
    %c0_44 = arith.constant 0 : index
    %69 = vector.load %arg5[%c6, %c0_44] : memref<9x128xf32, #tpu.memory_space<vmem>>, vector<1x64xf32>
    %70 = vector.broadcast %69 : vector<1x64xf32> to vector<16x64xf32>
    %71 = arith.addf %68, %70 : vector<16x64xf32>
    %cst_45 = arith.constant 5.000000e-01 : f32
    %72 = vector.broadcast %cst_45 : f32 to vector<16x64xf32>
    %73 = arith.mulf %72, %71 : vector<16x64xf32>
    %cst_46 = arith.constant 0.707106769 : f32
    %74 = vector.broadcast %cst_46 : f32 to vector<16x64xf32>
    %75 = arith.mulf %71, %74 : vector<16x64xf32>
    %76 = math.erf %75 : vector<16x64xf32>
    %cst_47 = arith.constant 1.000000e+00 : f32
    %77 = vector.broadcast %cst_47 : f32 to vector<16x64xf32>
    %78 = arith.addf %77, %76 : vector<16x64xf32>
    %79 = arith.mulf %73, %78 : vector<16x64xf32>
    %80 = arith.addf %79, %50 : vector<16x64xf32>
    %c3_48 = arith.constant 3 : index
    %c0_49 = arith.constant 0 : index
    %c0_50 = arith.constant 0 : index
    %81 = vector.load %arg2[%c3_48, %c0_49, %c0_50] : memref<4x32x32xf32, #tpu.memory_space<vmem>>, vector<1x32x32xf32>
    %82 = vector.shape_cast %81 : vector<1x32x32xf32> to vector<32x32xf32>
    %cst_51 = arith.constant dense<0.000000e+00> : vector<16x32xf32>
    %83 = tpu.matmul %64, %82, %cst_51 {dimension_numbers = #tpu.dot_dimension_numbers<[1], [0], [0], [1], [0, 0, 1, 1], [], []>} : vector<16x32xf32>, vector<32x32xf32>, vector<16x32xf32> -> vector<16x32xf32>
    %c4 = arith.constant 4 : index
    %c0_52 = arith.constant 0 : index
    %84 = vector.load %arg5[%c4, %c0_52] : memref<9x128xf32, #tpu.memory_space<vmem>>, vector<1x32xf32>
    %85 = vector.broadcast %84 : vector<1x32xf32> to vector<16x32xf32>
    %86 = arith.addf %83, %85 : vector<16x32xf32>
    %cst_53 = arith.constant 5.000000e-01 : f32
    %87 = vector.broadcast %cst_53 : f32 to vector<16x32xf32>
    %88 = arith.mulf %87, %86 : vector<16x32xf32>
    %cst_54 = arith.constant 0.707106769 : f32
    %89 = vector.broadcast %cst_54 : f32 to vector<16x32xf32>
    %90 = arith.mulf %86, %89 : vector<16x32xf32>
    %91 = math.erf %90 : vector<16x32xf32>
    %cst_55 = arith.constant 1.000000e+00 : f32
    %92 = vector.broadcast %cst_55 : f32 to vector<16x32xf32>
    %93 = arith.addf %92, %91 : vector<16x32xf32>
    %94 = arith.mulf %88, %93 : vector<16x32xf32>
    %95 = tpu.concatenate %80, %94 in 1 : vector<16x64xf32>, vector<16x32xf32> -> vector<16x96xf32>
    %c3_56 = arith.constant 3 : index
    %c0_57 = arith.constant 0 : index
    %c0_58 = arith.constant 0 : index
    %96 = vector.load %arg3[%c3_56, %c0_57, %c0_58] : memref<4x96x64xf32, #tpu.memory_space<vmem>>, vector<1x96x64xf32>
    %97 = vector.shape_cast %96 : vector<1x96x64xf32> to vector<96x64xf32>
    %cst_59 = arith.constant dense<0.000000e+00> : vector<16x64xf32>
    %98 = tpu.matmul %95, %97, %cst_59 {dimension_numbers = #tpu.dot_dimension_numbers<[1], [0], [0], [1], [0, 0, 1, 1], [], []>} : vector<16x96xf32>, vector<96x64xf32>, vector<16x64xf32> -> vector<16x64xf32>
    %c7 = arith.constant 7 : index
    %c0_60 = arith.constant 0 : index
    %99 = vector.load %arg5[%c7, %c0_60] : memref<9x128xf32, #tpu.memory_space<vmem>>, vector<1x64xf32>
    %100 = vector.broadcast %99 : vector<1x64xf32> to vector<16x64xf32>
    %101 = arith.addf %98, %100 : vector<16x64xf32>
    %cst_61 = arith.constant 5.000000e-01 : f32
    %102 = vector.broadcast %cst_61 : f32 to vector<16x64xf32>
    %103 = arith.mulf %102, %101 : vector<16x64xf32>
    %cst_62 = arith.constant 0.707106769 : f32
    %104 = vector.broadcast %cst_62 : f32 to vector<16x64xf32>
    %105 = arith.mulf %101, %104 : vector<16x64xf32>
    %106 = math.erf %105 : vector<16x64xf32>
    %cst_63 = arith.constant 1.000000e+00 : f32
    %107 = vector.broadcast %cst_63 : f32 to vector<16x64xf32>
    %108 = arith.addf %107, %106 : vector<16x64xf32>
    %109 = arith.mulf %103, %108 : vector<16x64xf32>
    %c0_64 = arith.constant 0 : index
    %c0_65 = arith.constant 0 : index
    %110 = vector.load %arg4[%c0_64, %c0_65] : memref<64x128xf32, #tpu.memory_space<vmem>>, vector<64x128xf32>
    %cst_66 = arith.constant dense<0.000000e+00> : vector<16x128xf32>
    %111 = tpu.matmul %109, %110, %cst_66 {dimension_numbers = #tpu.dot_dimension_numbers<[1], [0], [0], [1], [0, 0, 1, 1], [], []>} : vector<16x64xf32>, vector<64x128xf32>, vector<16x128xf32> -> vector<16x128xf32>
    %c8 = arith.constant 8 : index
    %c0_67 = arith.constant 0 : index
    %112 = vector.load %arg5[%c8, %c0_67] : memref<9x128xf32, #tpu.memory_space<vmem>>, vector<1x128xf32>
    %113 = vector.broadcast %112 : vector<1x128xf32> to vector<16x128xf32>
    %114 = arith.addf %111, %113 : vector<16x128xf32>
    %c0_68 = arith.constant 0 : index
    %c0_69 = arith.constant 0 : index
    %115 = vector.load %arg6[%c0_68, %c0_69] : memref<16x128xf32, #tpu.memory_space<vmem>>, vector<16x128xf32>
    tpu.vector_store %arg6[%c0_68, %c0_69], %114 {strides = array<i32>} : memref<16x128xf32, #tpu.memory_space<vmem>>, vector<16x128xf32>,
    return
  }
}

</mosaic_0001>

<llo_original>
// kernel: tpu_custom_call.1
$region0: #{tpu_custom_call.1}
  #allocation0 [shape = 'u32[]', space=smem, size = 0x4, offset = 0x4, fixed_abs, tag = 'smem constant byte address 0x4 - core index']
  #allocation1 [shape = 'u32[72,128]{1,0:T(1,128)}', space=vmem, size = 0x9000, scoped, tag = 'internal scratch']
  %s0 = inlined_call_operand.vmem [shape: f32[16,32], index: 0, kind: input, shape index: {}]
  %s1 = inlined_call_operand.vmem [shape: f32[16,32], index: 1, kind: input, shape index: {}]
  %s2 = inlined_call_operand.vmem [shape: f32[4,32,32], index: 2, kind: input, shape index: {}]
  %s3 = inlined_call_operand.vmem [shape: f32[4,96,64], index: 3, kind: input, shape index: {}]
  %s4 = inlined_call_operand.vmem [shape: f32[64,128], index: 4, kind: input, shape index: {}]
  %s5 = inlined_call_operand.vmem [shape: f32[9,128], index: 5, kind: input, shape index: {}]
  %s6 = inlined_call_operand.hbm [shape: f32[16,128], index: 6, kind: output, shape index: {}]
  %s7 = sld [smem:[#allocation0]]
  $region34: #{tpu_custom_call.1} parent=0
    _
  %s9 = ssub.s32 1, %s7
  %s10 = scalar_select 0, %s9, %s7
  $region1: #{tpu_custom_call.1} parent=0
    #allocation2 [shape = 'u8[8192]{0}', space=vmem, size = 0x2000, scoped, tag = 'output window, operand 0, single buffered']
    #allocation3 [shape = 's32[1]{0}', space=sflag, size = 0x4, scoped, tag = 'scoped memory for tpu_custom_call.1']
    %11 = vsyncpa [#allocation3], 0
    // Predicated region
    $region2: #{tpu_custom_call.1} parent=1 // pred_check
      _
    $region3: #{tpu_custom_call.1} parent=1 // pred_check_branch
      %13 = sbr.rel (0) target = $region5
    $region4: #{tpu_custom_call.1} parent=1 // pred_region
      _
    $region5: #{tpu_custom_call.1} parent=1 // pred_fallthru
      _
    // Predicated region
    $region6: #{tpu_custom_call.1} parent=1 // pred_check
      _
    $region7: #{tpu_custom_call.1} parent=1 // pred_check_branch
      %15 = sbr.rel (0) target = $region9
    $region8: #{tpu_custom_call.1} parent=1 // pred_region
      _
    $region9: #{tpu_custom_call.1} parent=1 // pred_fallthru
      _
    // Predicated region
    $region10: #{tpu_custom_call.1} parent=1 // pred_check
      _
    $region11: #{tpu_custom_call.1} parent=1 // pred_check_branch
      %17 = sbr.rel (0) target = $region13
    $region12: #{tpu_custom_call.1} parent=1 // pred_region
      _
    $region13: #{tpu_custom_call.1} parent=1 // pred_fallthru
      _
    // Predicated region
    $region14: #{tpu_custom_call.1} parent=1 // pred_check
      _
    $region15: #{tpu_custom_call.1} parent=1 // pred_check_branch
      %19 = sbr.rel (0) target = $region17
    $region16: #{tpu_custom_call.1} parent=1 // pred_region
      _
    $region17: #{tpu_custom_call.1} parent=1 // pred_fallthru
      _
    // Predicated region
    $region18: #{tpu_custom_call.1} parent=1 // pred_check
      _
    $region19: #{tpu_custom_call.1} parent=1 // pred_check_branch
      %21 = sbr.rel (0) target = $region21
    $region20: #{tpu_custom_call.1} parent=1 // pred_region
      _
    $region21: #{tpu_custom_call.1} parent=1 // pred_fallthru
      _
    // Predicated region
    $region22: #{tpu_custom_call.1} parent=1 // pred_check
      _
    $region23: #{tpu_custom_call.1} parent=1 // pred_check_branch
      %23 = sbr.rel (0) target = $region25
    $region24: #{tpu_custom_call.1} parent=1 // pred_region
      _
    $region25: #{tpu_custom_call.1} parent=1 // pred_fallthru
      _
    %v24 = vld [vmem:[%s0] sm:$0xff]
    %v25 = vld [vmem:[%s0 + $0x8] sm:$0xff]
    %v26 = vld [vmem:[%s3] sm:$0xff]
    %v27 = vld [vmem:[%s3 + $0x8] sm:$0xff]
    %v28 = vld [vmem:[%s3 + $0x10] sm:$0xff]
    %v29 = vld [vmem:[%s3 + $0x18] sm:$0xff]
    %v30 = vld [vmem:[%s5 + $0x1] sm:$0x1]
    %v31 = vperm.slane %v30, 0
    %vm32 = vcmask 261120
    %v34 = vsel %vm32, %v24, 0
    %v37 = vsel %vm32, %v25, 0
    %39 = vmatpush.msra.mxu0 0.0
    %40 = vmatpush.msra.mxu0 0.0
    %41 = vmatpush.msra.mxu0 0.0
    %42 = vmatpush.msra.mxu0 0.0
    %43 = vmatpush.msra.mxu0 0.0
    %44 = vmatpush.msra.mxu0 0.0
    %45 = vmatpush.msra.mxu0 0.0
    %46 = vmatpush.msra.mxu0 0.0
    %47 = vmatpush.msra.mxu0 0.0
    %48 = vmatpush.msra.mxu0 0.0
    %49 = vmatpush.msra.mxu0 0.0
    %50 = vmatpush.msra.mxu0 0.0
    %51 = vmatpush.msra.mxu0 %v29
    %52 = vmatpush.msra.mxu0 %v28
    %53 = vmatpush.msra.mxu0 %v27
    %54 = vmatpush.msra.mxu0 %v26
    %55 = vmatmul.f32.gmra.mxu0 %v34
    %v56 = vpop.f32.mrf.mxu0
    %v57 = vadd.f32 %v31, %v56
    %58 = vmatmul.f32.gmra.mxu0 %v37
    %v59 = vpop.f32.mrf.mxu0
    %v60 = vadd.f32 %v31, %v59
    %61 = vdwg.mxu0
    %v62 = vld [vmem:[%s1] sm:$0xff]
    %v63 = vld [vmem:[%s1 + $0x8] sm:$0xff]
    %v64 = vld [vmem:[%s2] sm:$0xff]
    %v65 = vld [vmem:[%s2 + $0x8] sm:$0xff]
    %v66 = vld [vmem:[%s2 + $0x10] sm:$0xff]
    %v67 = vld [vmem:[%s2 + $0x18] sm:$0xff]
    %v68 = vld [vmem:[%s5] sm:$0x1]
    %v69 = vperm.slane %v68, 0
    %v71 = vsel %vm32, %v62, 0
    %v74 = vsel %vm32, %v63, 0
    %76 = vmatpush.msra.mxu0 0.0
    %77 = vmatpush.msra.mxu0 0.0
    %78 = vmatpush.msra.mxu0 0.0
    %79 = vmatpush.msra.mxu0 0.0
    %80 = vmatpush.msra.mxu0 0.0
    %81 = vmatpush.msra.mxu0 0.0
    %82 = vmatpush.msra.mxu0 0.0
    %83 = vmatpush.msra.mxu0 0.0
    %84 = vmatpush.msra.mxu0 0.0
    %85 = vmatpush.msra.mxu0 0.0
    %86 = vmatpush.msra.mxu0 0.0
    %87 = vmatpush.msra.mxu0 0.0
    %88 = vmatpush.msra.mxu0 %v67
    %89 = vmatpush.msra.mxu0 %v66
    %90 = vmatpush.msra.mxu0 %v65
    %91 = vmatpush.msra.mxu0 %v64
    %92 = vmatmul.f32.gmra.mxu0 %v71
    %v93 = vpop.f32.mrf.mxu0
    %v94 = vadd.f32 %v69, %v93
    %95 = vmatmul.f32.gmra.mxu0 %v74
    %v96 = vpop.f32.mrf.mxu0
    %v97 = vadd.f32 %v69, %v96
    %98 = vdwg.mxu0
    %v99 = vmul.f32 %v94, 0.5
    %v100 = vmul.f32 %v97, 0.5
    %v101 = vmul.f32 %v94, 0.70710677
    %v102 = vmul.f32 %v97, 0.70710677
    %v103 = vmul.f32 %v101, %v101
    %v104 = vmin.f32 16.0, %v103
    %v105 = vmul.f32 %v104, 2.1237322e-06
    %v106 = vadd.f32 %v105, 0.00028619796
    %v107 = vmul.f32 %v104, %v106
    %v108 = vadd.f32 %v107, 0.0036580483
    %v109 = vmul.f32 %v104, %v108
    %v110 = vadd.f32 %v109, 0.05243302
    %v111 = vmul.f32 %v104, %v110
    %v112 = vadd.f32 %v111, 0.18741608
    %v113 = vmul.f32 %v104, %v112
    %v114 = vadd.f32 %v113, 1.1283791
    %v115 = vmul.f32 %v101, %v114
    %v116 = vmul.f32 %v104, 3.8918573e-05
    %v117 = vadd.f32 %v116, 0.001143296
    %v118 = vmul.f32 %v104, %v117
    %v119 = vadd.f32 %v118, 0.014752088
    %v120 = vmul.f32 %v104, %v119
    %v121 = vadd.f32 %v120, 0.112945676
    %v122 = vmul.f32 %v104, %v121
    %v123 = vadd.f32 %v122, 0.4994258
    %v124 = vmul.f32 %v104, %v123
    %v125 = vadd.f32 %v124, 1.0
    %v126 = vrcp.pop %v125
    %v127 = vmul.f32 %v125, %v126
    %v128 = vsub.f32 1.0, %v127
    %v129 = vmul.f32 %v126, %v128
    %v130 = vadd.f32 %v126, %v129
    %vm131 = vweird.f32 %v125
    %vm132 = vweird.f32 %v126
    %vm133 = vmor %vm131, %vm132
    %v134 = vsel %vm133, %v126, %v130
    %v135 = vand.u32 2147483647, %v125
    %vm136 = vcmp.eq.f32.partialorder %v135, 8.507059e+37
    %v137 = vand.u32 %v125, 2147483648
    %v138 = vor.u32 1.1754944e-38, %v137
    %v139 = vsel %vm136, %v138, %v134
    %v140 = vmul.f32 %v115, %v139
    %v141 = vmin.f32 %v140, 1.0
    %v142 = vmax.f32 %v141, -1.0
    %v143 = vmul.f32 %v102, %v102
    %v144 = vmin.f32 16.0, %v143
    %v145 = vmul.f32 %v144, 2.1237322e-06
    %v146 = vadd.f32 %v145, 0.00028619796
    %v147 = vmul.f32 %v144, %v146
    %v148 = vadd.f32 %v147, 0.0036580483
    %v149 = vmul.f32 %v144, %v148
    %v150 = vadd.f32 %v149, 0.05243302
    %v151 = vmul.f32 %v144, %v150
    %v152 = vadd.f32 %v151, 0.18741608
    %v153 = vmul.f32 %v144, %v152
    %v154 = vadd.f32 %v153, 1.1283791
    %v155 = vmul.f32 %v102, %v154
    %v156 = vmul.f32 %v144, 3.8918573e-05
    %v157 = vadd.f32 %v156, 0.001143296
    %v158 = vmul.f32 %v144, %v157
    %v159 = vadd.f32 %v158, 0.014752088
    %v160 = vmul.f32 %v144, %v159
    %v161 = vadd.f32 %v160, 0.112945676
    %v162 = vmul.f32 %v144, %v161
    %v163 = vadd.f32 %v162, 0.4994258
    %v164 = vmul.f32 %v144, %v163
    %v165 = vadd.f32 %v164, 1.0
    %v166 = vrcp.pop %v165
    %v167 = vmul.f32 %v165, %v166
    %v168 = vsub.f32 1.0, %v167
    %v169 = vmul.f32 %v166, %v168
    %v170 = vadd.f32 %v166, %v169
    %vm171 = vweird.f32 %v165
    %vm172 = vweird.f32 %v166
    %vm173 = vmor %vm171, %vm172
    %v174 = vsel %vm173, %v166, %v170
    %v175 = vand.u32 2147483647, %v165
    %vm176 = vcmp.eq.f32.partialorder %v175, 8.507059e+37
    %v177 = vand.u32 %v165, 2147483648
    %v178 = vor.u32 1.1754944e-38, %v177
    %v179 = vsel %vm176, %v178, %v174
    %v180 = vmul.f32 %v155, %v179
    %v181 = vmin.f32 %v180, 1.0
    %v182 = vmax.f32 %v181, -1.0
    %v183 = vadd.f32 %v142, 1.0
    %v184 = vadd.f32 %v182, 1.0
    %v185 = vmul.f32 %v99, %v183
    %v186 = vmul.f32 %v100, %v184
    %s187 = scalar_lea.vmem %s2, 32
    %v188 = vld [vmem:[%s187] sm:$0xff]
    %v189 = vld [vmem:[%s187 + $0x8] sm:$0xff]
    %v190 = vld [vmem:[%s187 + $0x10] sm:$0xff]
    %v191 = vld [vmem:[%s187 + $0x18] sm:$0xff]
    %v192 = vld [vmem:[%s5 + $0x2] sm:$0x1]
    %v193 = vperm.slane %v192, 0
    %v195 = vsel %vm32, %v185, 0
    %v198 = vsel %vm32, %v186, 0
    %200 = vmatpush.msra.mxu0 0.0
    %201 = vmatpush.msra.mxu0 0.0
    %202 = vmatpush.msra.mxu0 0.0
    %203 = vmatpush.msra.mxu0 0.0
    %204 = vmatpush.msra.mxu0 0.0
    %205 = vmatpush.msra.mxu0 0.0
    %206 = vmatpush.msra.mxu0 0.0
    %207 = vmatpush.msra.mxu0 0.0
    %208 = vmatpush.msra.mxu0 0.0
    %209 = vmatpush.msra.mxu0 0.0
    %210 = vmatpush.msra.mxu0 0.0
    %211 = vmatpush.msra.mxu0 0.0
    %212 = vmatpush.msra.mxu0 %v191
    %213 = vmatpush.msra.mxu0 %v190
    %214 = vmatpush.msra.mxu0 %v189
    %215 = vmatpush.msra.mxu0 %v188
    %216 = vmatmul.f32.gmra.mxu0 %v195
    %v217 = vpop.f32.mrf.mxu0
    %v218 = vadd.f32 %v193, %v217
    %219 = vmatmul.f32.gmra.mxu0 %v198
    %v220 = vpop.f32.mrf.mxu0
    %v221 = vadd.f32 %v193, %v220
    %222 = vdwg.mxu0
    %v223 = vmul.f32 %v218, 0.5
    %v224 = vmul.f32 %v221, 0.5
    %v225 = vmul.f32 %v218, 0.70710677
    %v226 = vmul.f32 %v221, 0.70710677
    %v227 = vmul.f32 %v225, %v225
    %v228 = vmin.f32 16.0, %v227
    %v229 = vmul.f32 %v228, 2.1237322e-06
    %v230 = vadd.f32 %v229, 0.00028619796
    %v231 = vmul.f32 %v228, %v230
    %v232 = vadd.f32 %v231, 0.0036580483
    %v233 = vmul.f32 %v228, %v232
    %v234 = vadd.f32 %v233, 0.05243302
    %v235 = vmul.f32 %v228, %v234
    %v236 = vadd.f32 %v235, 0.18741608
    %v237 = vmul.f32 %v228, %v236
    %v238 = vadd.f32 %v237, 1.1283791
    %v239 = vmul.f32 %v225, %v238
    %v240 = vmul.f32 %v228, 3.8918573e-05
    %v241 = vadd.f32 %v240, 0.001143296
    %v242 = vmul.f32 %v228, %v241
    %v243 = vadd.f32 %v242, 0.014752088
    %v244 = vmul.f32 %v228, %v243
    %v245 = vadd.f32 %v244, 0.112945676
    %v246 = vmul.f32 %v228, %v245
    %v247 = vadd.f32 %v246, 0.4994258
    %v248 = vmul.f32 %v228, %v247
    %v249 = vadd.f32 %v248, 1.0
    %v250 = vrcp.pop %v249
    %v251 = vmul.f32 %v249, %v250
    %v252 = vsub.f32 1.0, %v251
    %v253 = vmul.f32 %v250, %v252
    %v254 = vadd.f32 %v250, %v253
    %vm255 = vweird.f32 %v249
    %vm256 = vweird.f32 %v250
    %vm257 = vmor %vm255, %vm256
    %v258 = vsel %vm257, %v250, %v254
    %v259 = vand.u32 2147483647, %v249
    %vm260 = vcmp.eq.f32.partialorder %v259, 8.507059e+37
    %v261 = vand.u32 %v249, 2147483648
    %v262 = vor.u32 1.1754944e-38, %v261
    %v263 = vsel %vm260, %v262, %v258
    %v264 = vmul.f32 %v239, %v263
    %v265 = vmin.f32 %v264, 1.0
    %v266 = vmax.f32 %v265, -1.0
    %v267 = vmul.f32 %v226, %v226
    %v268 = vmin.f32 16.0, %v267
    %v269 = vmul.f32 %v268, 2.1237322e-06
    %v270 = vadd.f32 %v269, 0.00028619796
    %v271 = vmul.f32 %v268, %v270
    %v272 = vadd.f32 %v271, 0.0036580483
    %v273 = vmul.f32 %v268, %v272
    %v274 = vadd.f32 %v273, 0.05243302
    %v275 = vmul.f32 %v268, %v274
    %v276 = vadd.f32 %v275, 0.18741608
    %v277 = vmul.f32 %v268, %v276
    %v278 = vadd.f32 %v277, 1.1283791
    %v279 = vmul.f32 %v226, %v278
    %v280 = vmul.f32 %v268, 3.8918573e-05
    %v281 = vadd.f32 %v280, 0.001143296
    %v282 = vmul.f32 %v268, %v281
    %v283 = vadd.f32 %v282, 0.014752088
    %v284 = vmul.f32 %v268, %v283
    %v285 = vadd.f32 %v284, 0.112945676
    %v286 = vmul.f32 %v268, %v285
    %v287 = vadd.f32 %v286, 0.4994258
    %v288 = vmul.f32 %v268, %v287
    %v289 = vadd.f32 %v288, 1.0
    %v290 = vrcp.pop %v289
    %v291 = vmul.f32 %v289, %v290
    %v292 = vsub.f32 1.0, %v291
    %v293 = vmul.f32 %v290, %v292
    %v294 = vadd.f32 %v290, %v293
    %vm295 = vweird.f32 %v289
    %vm296 = vweird.f32 %v290
    %vm297 = vmor %vm295, %vm296
    %v298 = vsel %vm297, %v290, %v294
    %v299 = vand.u32 2147483647, %v289
    %vm300 = vcmp.eq.f32.partialorder %v299, 8.507059e+37
    %v301 = vand.u32 %v289, 2147483648
    %v302 = vor.u32 1.1754944e-38, %v301
    %v303 = vsel %vm300, %v302, %v298
    %v304 = vmul.f32 %v279, %v303
    %v305 = vmin.f32 %v304, 1.0
    %v306 = vmax.f32 %v305, -1.0
    %v307 = vadd.f32 %v266, 1.0
    %v308 = vadd.f32 %v306, 1.0
    %v309 = vmul.f32 %v223, %v307
    %v310 = vmul.f32 %v224, %v308
    %313 = vrot.lane.b32.xlu0 %v309, 64
    %v314 = vpop.permute.xlu0 %313
    %315 = vrot.lane.b32.xlu0 %v310, 64
    %v316 = vpop.permute.xlu0 %315
    %vm319 = vcmask 523264
    %v320 = vsel %vm319, %v57, %v314
    %v321 = vsel %vm319, %v60, %v316
    %s322 = scalar_lea.vmem %s3, 96
    %v323 = vld [vmem:[%s322] sm:$0xff]
    %v324 = vld [vmem:[%s322 + $0x8] sm:$0xff]
    %v325 = vld [vmem:[%s322 + $0x10] sm:$0xff]
    %v326 = vld [vmem:[%s322 + $0x18] sm:$0xff]
    %v327 = vld [vmem:[%s322 + $0x20] sm:$0xff]
    %v328 = vld [vmem:[%s322 + $0x28] sm:$0xff]
    %v329 = vld [vmem:[%s322 + $0x30] sm:$0xff]
    %v330 = vld [vmem:[%s322 + $0x38] sm:$0xff]
    %v331 = vld [vmem:[%s322 + $0x40] sm:$0xff]
    %v332 = vld [vmem:[%s322 + $0x48] sm:$0xff]
    %v333 = vld [vmem:[%s322 + $0x50] sm:$0xff]
    %v334 = vld [vmem:[%s322 + $0x58] sm:$0xff]
    %v335 = vld [vmem:[%s5 + $0x5] sm:$0x1]
    %v336 = vperm.slane %v335, 0
    %vm337 = vcmask 785408
    %v339 = vsel %vm337, %v320, 0
    %v342 = vsel %vm337, %v321, 0
    %344 = vmatpush.msra.mxu0 0.0
    %345 = vmatpush.msra.mxu0 0.0
    %346 = vmatpush.msra.mxu0 0.0
    %347 = vmatpush.msra.mxu0 0.0
    %348 = vmatpush.msra.mxu0 %v334
    %349 = vmatpush.msra.mxu0 %v333
    %350 = vmatpush.msra.mxu0 %v332
    %351 = vmatpush.msra.mxu0 %v331
    %352 = vmatpush.msra.mxu0 %v330
    %353 = vmatpush.msra.mxu0 %v329
    %354 = vmatpush.msra.mxu0 %v328
    %355 = vmatpush.msra.mxu0 %v327
    %356 = vmatpush.msra.mxu0 %v326
    %357 = vmatpush.msra.mxu0 %v325
    %358 = vmatpush.msra.mxu0 %v324
    %359 = vmatpush.msra.mxu0 %v323
    %360 = vmatmul.f32.gmra.mxu0 %v339
    %v361 = vpop.f32.mrf.mxu0
    %v362 = vadd.f32 %v336, %v361
    %363 = vmatmul.f32.gmra.mxu0 %v342
    %v364 = vpop.f32.mrf.mxu0
    %v365 = vadd.f32 %v336, %v364
    %366 = vdwg.mxu0
    %v367 = vmul.f32 %v362, 0.5
    %v368 = vmul.f32 %v365, 0.5
    %v369 = vmul.f32 %v362, 0.70710677
    %v370 = vmul.f32 %v365, 0.70710677
    %v371 = vmul.f32 %v369, %v369
    %v372 = vmin.f32 16.0, %v371
    %v373 = vmul.f32 %v372, 2.1237322e-06
    %v374 = vadd.f32 %v373, 0.00028619796
    %v375 = vmul.f32 %v372, %v374
    %v376 = vadd.f32 %v375, 0.0036580483
    %v377 = vmul.f32 %v372, %v376
    %v378 = vadd.f32 %v377, 0.05243302
    %v379 = vmul.f32 %v372, %v378
    %v380 = vadd.f32 %v379, 0.18741608
    %v381 = vmul.f32 %v372, %v380
    %v382 = vadd.f32 %v381, 1.1283791
    %v383 = vmul.f32 %v369, %v382
    %v384 = vmul.f32 %v372, 3.8918573e-05
    %v385 = vadd.f32 %v384, 0.001143296
    %v386 = vmul.f32 %v372, %v385
    %v387 = vadd.f32 %v386, 0.014752088
    %v388 = vmul.f32 %v372, %v387
    %v389 = vadd.f32 %v388, 0.112945676
    %v390 = vmul.f32 %v372, %v389
    %v391 = vadd.f32 %v390, 0.4994258
    %v392 = vmul.f32 %v372, %v391
    %v393 = vadd.f32 %v392, 1.0
    %v394 = vrcp.pop %v393
    %v395 = vmul.f32 %v393, %v394
    %v396 = vsub.f32 1.0, %v395
    %v397 = vmul.f32 %v394, %v396
    %v398 = vadd.f32 %v394, %v397
    %vm399 = vweird.f32 %v393
    %vm400 = vweird.f32 %v394
    %vm401 = vmor %vm399, %vm400
    %v402 = vsel %vm401, %v394, %v398
    %v403 = vand.u32 2147483647, %v393
    %vm404 = vcmp.eq.f32.partialorder %v403, 8.507059e+37
    %v405 = vand.u32 %v393, 2147483648
    %v406 = vor.u32 1.1754944e-38, %v405
    %v407 = vsel %vm404, %v406, %v402
    %v408 = vmul.f32 %v383, %v407
    %v409 = vmin.f32 %v408, 1.0
    %v410 = vmax.f32 %v409, -1.0
    %v411 = vmul.f32 %v370, %v370
    %v412 = vmin.f32 16.0, %v411
    %v413 = vmul.f32 %v412, 2.1237322e-06
    %v414 = vadd.f32 %v413, 0.00028619796
    %v415 = vmul.f32 %v412, %v414
    %v416 = vadd.f32 %v415, 0.0036580483
    %v417 = vmul.f32 %v412, %v416
    %v418 = vadd.f32 %v417, 0.05243302
    %v419 = vmul.f32 %v412, %v418
    %v420 = vadd.f32 %v419, 0.18741608
    %v421 = vmul.f32 %v412, %v420
    %v422 = vadd.f32 %v421, 1.1283791
    %v423 = vmul.f32 %v370, %v422
    %v424 = vmul.f32 %v412, 3.8918573e-05
    %v425 = vadd.f32 %v424, 0.001143296
    %v426 = vmul.f32 %v412, %v425
    %v427 = vadd.f32 %v426, 0.014752088
    %v428 = vmul.f32 %v412, %v427
    %v429 = vadd.f32 %v428, 0.112945676
    %v430 = vmul.f32 %v412, %v429
    %v431 = vadd.f32 %v430, 0.4994258
    %v432 = vmul.f32 %v412, %v431
    %v433 = vadd.f32 %v432, 1.0
    %v434 = vrcp.pop %v433
    %v435 = vmul.f32 %v433, %v434
    %v436 = vsub.f32 1.0, %v435
    %v437 = vmul.f32 %v434, %v436
    %v438 = vadd.f32 %v434, %v437
    %vm439 = vweird.f32 %v433
    %vm440 = vweird.f32 %v434
    %vm441 = vmor %vm439, %vm440
    %v442 = vsel %vm441, %v434, %v438
    %v443 = vand.u32 2147483647, %v433
    %vm444 = vcmp.eq.f32.partialorder %v443, 8.507059e+37
    %v445 = vand.u32 %v433, 2147483648
    %v446 = vor.u32 1.1754944e-38, %v445
    %v447 = vsel %vm444, %v446, %v442
    %v448 = vmul.f32 %v423, %v447
    %v449 = vmin.f32 %v448, 1.0
    %v450 = vmax.f32 %v449, -1.0
    %v451 = vadd.f32 %v410, 1.0
    %v452 = vadd.f32 %v450, 1.0
    %v453 = vmul.f32 %v367, %v451
    %v454 = vmul.f32 %v368, %v452
    %s455 = scalar_lea.vmem %s2, 64
    %v456 = vld [vmem:[%s455] sm:$0xff]
    %v457 = vld [vmem:[%s455 + $0x8] sm:$0xff]
    %v458 = vld [vmem:[%s455 + $0x10] sm:$0xff]
    %v459 = vld [vmem:[%s455 + $0x18] sm:$0xff]
    %v460 = vld [vmem:[%s5 + $0x3] sm:$0x1]
    %v461 = vperm.slane %v460, 0
    %v462 = vsel %vm32, %v309, 0
    %v464 = vsel %vm32, %v310, 0
    %466 = vmatpush.msra.mxu0 0.0
    %467 = vmatpush.msra.mxu0 0.0
    %468 = vmatpush.msra.mxu0 0.0
    %469 = vmatpush.msra.mxu0 0.0
    %470 = vmatpush.msra.mxu0 0.0
    %471 = vmatpush.msra.mxu0 0.0
    %472 = vmatpush.msra.mxu0 0.0
    %473 = vmatpush.msra.mxu0 0.0
    %474 = vmatpush.msra.mxu0 0.0
    %475 = vmatpush.msra.mxu0 0.0
    %476 = vmatpush.msra.mxu0 0.0
    %477 = vmatpush.msra.mxu0 0.0
    %478 = vmatpush.msra.mxu0 %v459
    %479 = vmatpush.msra.mxu0 %v458
    %480 = vmatpush.msra.mxu0 %v457
    %481 = vmatpush.msra.mxu0 %v456
    %482 = vmatmul.f32.gmra.mxu0 %v462
    %v483 = vpop.f32.mrf.mxu0
    %v484 = vadd.f32 %v461, %v483
    %485 = vmatmul.f32.gmra.mxu0 %v464
    %v486 = vpop.f32.mrf.mxu0
    %v487 = vadd.f32 %v461, %v486
    %488 = vdwg.mxu0
    %v489 = vmul.f32 %v484, 0.5
    %v490 = vmul.f32 %v487, 0.5
    %v491 = vmul.f32 %v484, 0.70710677
    %v492 = vmul.f32 %v487, 0.70710677
    %v493 = vmul.f32 %v491, %v491
    %v494 = vmin.f32 16.0, %v493
    %v495 = vmul.f32 %v494, 2.1237322e-06
    %v496 = vadd.f32 %v495, 0.00028619796
    %v497 = vmul.f32 %v494, %v496
    %v498 = vadd.f32 %v497, 0.0036580483
    %v499 = vmul.f32 %v494, %v498
    %v500 = vadd.f32 %v499, 0.05243302
    %v501 = vmul.f32 %v494, %v500
    %v502 = vadd.f32 %v501, 0.18741608
    %v503 = vmul.f32 %v494, %v502
    %v504 = vadd.f32 %v503, 1.1283791
    %v505 = vmul.f32 %v491, %v504
    %v506 = vmul.f32 %v494, 3.8918573e-05
    %v507 = vadd.f32 %v506, 0.001143296
    %v508 = vmul.f32 %v494, %v507
    %v509 = vadd.f32 %v508, 0.014752088
    %v510 = vmul.f32 %v494, %v509
    %v511 = vadd.f32 %v510, 0.112945676
    %v512 = vmul.f32 %v494, %v511
    %v513 = vadd.f32 %v512, 0.4994258
    %v514 = vmul.f32 %v494, %v513
    %v515 = vadd.f32 %v514, 1.0
    %v516 = vrcp.pop %v515
    %v517 = vmul.f32 %v515, %v516
    %v518 = vsub.f32 1.0, %v517
    %v519 = vmul.f32 %v516, %v518
    %v520 = vadd.f32 %v516, %v519
    %vm521 = vweird.f32 %v515
    %vm522 = vweird.f32 %v516
    %vm523 = vmor %vm521, %vm522
    %v524 = vsel %vm523, %v516, %v520
    %v525 = vand.u32 2147483647, %v515
    %vm526 = vcmp.eq.f32.partialorder %v525, 8.507059e+37
    %v527 = vand.u32 %v515, 2147483648
    %v528 = vor.u32 1.1754944e-38, %v527
    %v529 = vsel %vm526, %v528, %v524
    %v530 = vmul.f32 %v505, %v529
    %v531 = vmin.f32 %v530, 1.0
    %v532 = vmax.f32 %v531, -1.0
    %v533 = vmul.f32 %v492, %v492
    %v534 = vmin.f32 16.0, %v533
    %v535 = vmul.f32 %v534, 2.1237322e-06
    %v536 = vadd.f32 %v535, 0.00028619796
    %v537 = vmul.f32 %v534, %v536
    %v538 = vadd.f32 %v537, 0.0036580483
    %v539 = vmul.f32 %v534, %v538
    %v540 = vadd.f32 %v539, 0.05243302
    %v541 = vmul.f32 %v534, %v540
    %v542 = vadd.f32 %v541, 0.18741608
    %v543 = vmul.f32 %v534, %v542
    %v544 = vadd.f32 %v543, 1.1283791
    %v545 = vmul.f32 %v492, %v544
    %v546 = vmul.f32 %v534, 3.8918573e-05
    %v547 = vadd.f32 %v546, 0.001143296
    %v548 = vmul.f32 %v534, %v547
    %v549 = vadd.f32 %v548, 0.014752088
    %v550 = vmul.f32 %v534, %v549
    %v551 = vadd.f32 %v550, 0.112945676
    %v552 = vmul.f32 %v534, %v551
    %v553 = vadd.f32 %v552, 0.4994258
    %v554 = vmul.f32 %v534, %v553
    %v555 = vadd.f32 %v554, 1.0
    %v556 = vrcp.pop %v555
    %v557 = vmul.f32 %v555, %v556
    %v558 = vsub.f32 1.0, %v557
    %v559 = vmul.f32 %v556, %v558
    %v560 = vadd.f32 %v556, %v559
    %vm561 = vweird.f32 %v555
    %vm562 = vweird.f32 %v556
    %vm563 = vmor %vm561, %vm562
    %v564 = vsel %vm563, %v556, %v560
    %v565 = vand.u32 2147483647, %v555
    %vm566 = vcmp.eq.f32.partialorder %v565, 8.507059e+37
    %v567 = vand.u32 %v555, 2147483648
    %v568 = vor.u32 1.1754944e-38, %v567
    %v569 = vsel %vm566, %v568, %v564
    %v570 = vmul.f32 %v545, %v569
    %v571 = vmin.f32 %v570, 1.0
    %v572 = vmax.f32 %v571, -1.0
    %v573 = vadd.f32 %v532, 1.0
    %v574 = vadd.f32 %v572, 1.0
    %v575 = vmul.f32 %v489, %v573
    %v576 = vmul.f32 %v490, %v574
    %579 = vrot.lane.b32.xlu0 %v575, 64
    %v580 = vpop.permute.xlu0 %579
    %581 = vrot.lane.b32.xlu0 %v576, 64
    %v582 = vpop.permute.xlu0 %581
    %v585 = vsel %vm319, %v453, %v580
    %v586 = vsel %vm319, %v454, %v582
    %s587 = scalar_lea.vmem %s3, 192
    %v588 = vld [vmem:[%s587] sm:$0xff]
    %v589 = vld [vmem:[%s587 + $0x8] sm:$0xff]
    %v590 = vld [vmem:[%s587 + $0x10] sm:$0xff]
    %v591 = vld [vmem:[%s587 + $0x18] sm:$0xff]
    %v592 = vld [vmem:[%s587 + $0x20] sm:$0xff]
    %v593 = vld [vmem:[%s587 + $0x28] sm:$0xff]
    %v594 = vld [vmem:[%s587 + $0x30] sm:$0xff]
    %v595 = vld [vmem:[%s587 + $0x38] sm:$0xff]
    %v596 = vld [vmem:[%s587 + $0x40] sm:$0xff]
    %v597 = vld [vmem:[%s587 + $0x48] sm:$0xff]
    %v598 = vld [vmem:[%s587 + $0x50] sm:$0xff]
    %v599 = vld [vmem:[%s587 + $0x58] sm:$0xff]
    %v600 = vld [vmem:[%s5 + $0x6] sm:$0x1]
    %v601 = vperm.slane %v600, 0
    %v603 = vsel %vm337, %v585, 0
    %v606 = vsel %vm337, %v586, 0
    %608 = vmatpush.msra.mxu0 0.0
    %609 = vmatpush.msra.mxu0 0.0
    %610 = vmatpush.msra.mxu0 0.0
    %611 = vmatpush.msra.mxu0 0.0
    %612 = vmatpush.msra.mxu0 %v599
    %613 = vmatpush.msra.mxu0 %v598
    %614 = vmatpush.msra.mxu0 %v597
    %615 = vmatpush.msra.mxu0 %v596
    %616 = vmatpush.msra.mxu0 %v595
    %617 = vmatpush.msra.mxu0 %v594
    %618 = vmatpush.msra.mxu0 %v593
    %619 = vmatpush.msra.mxu0 %v592
    %620 = vmatpush.msra.mxu0 %v591
    %621 = vmatpush.msra.mxu0 %v590
    %622 = vmatpush.msra.mxu0 %v589
    %623 = vmatpush.msra.mxu0 %v588
    %624 = vmatmul.f32.gmra.mxu0 %v603
    %v625 = vpop.f32.mrf.mxu0
    %v626 = vadd.f32 %v601, %v625
    %627 = vmatmul.f32.gmra.mxu0 %v606
    %v628 = vpop.f32.mrf.mxu0
    %v629 = vadd.f32 %v601, %v628
    %630 = vdwg.mxu0
    %v631 = vmul.f32 %v626, 0.5
    %v632 = vmul.f32 %v629, 0.5
    %v633 = vmul.f32 %v626, 0.70710677
    %v634 = vmul.f32 %v629, 0.70710677
    %v635 = vmul.f32 %v633, %v633
    %v636 = vmin.f32 16.0, %v635
    %v637 = vmul.f32 %v636, 2.1237322e-06
    %v638 = vadd.f32 %v637, 0.00028619796
    %v639 = vmul.f32 %v636, %v638
    %v640 = vadd.f32 %v639, 0.0036580483
    %v641 = vmul.f32 %v636, %v640
    %v642 = vadd.f32 %v641, 0.05243302
    %v643 = vmul.f32 %v636, %v642
    %v644 = vadd.f32 %v643, 0.18741608
    %v645 = vmul.f32 %v636, %v644
    %v646 = vadd.f32 %v645, 1.1283791
    %v647 = vmul.f32 %v633, %v646
    %v648 = vmul.f32 %v636, 3.8918573e-05
    %v649 = vadd.f32 %v648, 0.001143296
    %v650 = vmul.f32 %v636, %v649
    %v651 = vadd.f32 %v650, 0.014752088
    %v652 = vmul.f32 %v636, %v651
    %v653 = vadd.f32 %v652, 0.112945676
    %v654 = vmul.f32 %v636, %v653
    %v655 = vadd.f32 %v654, 0.4994258
    %v656 = vmul.f32 %v636, %v655
    %v657 = vadd.f32 %v656, 1.0
    %v658 = vrcp.pop %v657
    %v659 = vmul.f32 %v657, %v658
    %v660 = vsub.f32 1.0, %v659
    %v661 = vmul.f32 %v658, %v660
    %v662 = vadd.f32 %v658, %v661
    %vm663 = vweird.f32 %v657
    %vm664 = vweird.f32 %v658
    %vm665 = vmor %vm663, %vm664
    %v666 = vsel %vm665, %v658, %v662
    %v667 = vand.u32 2147483647, %v657
    %vm668 = vcmp.eq.f32.partialorder %v667, 8.507059e+37
    %v669 = vand.u32 %v657, 2147483648
    %v670 = vor.u32 1.1754944e-38, %v669
    %v671 = vsel %vm668, %v670, %v666
    %v672 = vmul.f32 %v647, %v671
    %v673 = vmin.f32 %v672, 1.0
    %v674 = vmax.f32 %v673, -1.0
    %v675 = vmul.f32 %v634, %v634
    %v676 = vmin.f32 16.0, %v675
    %v677 = vmul.f32 %v676, 2.1237322e-06
    %v678 = vadd.f32 %v677, 0.00028619796
    %v679 = vmul.f32 %v676, %v678
    %v680 = vadd.f32 %v679, 0.0036580483
    %v681 = vmul.f32 %v676, %v680
    %v682 = vadd.f32 %v681, 0.05243302
    %v683 = vmul.f32 %v676, %v682
    %v684 = vadd.f32 %v683, 0.18741608
    %v685 = vmul.f32 %v676, %v684
    %v686 = vadd.f32 %v685, 1.1283791
    %v687 = vmul.f32 %v634, %v686
    %v688 = vmul.f32 %v676, 3.8918573e-05
    %v689 = vadd.f32 %v688, 0.001143296
    %v690 = vmul.f32 %v676, %v689
    %v691 = vadd.f32 %v690, 0.014752088
    %v692 = vmul.f32 %v676, %v691
    %v693 = vadd.f32 %v692, 0.112945676
    %v694 = vmul.f32 %v676, %v693
    %v695 = vadd.f32 %v694, 0.4994258
    %v696 = vmul.f32 %v676, %v695
    %v697 = vadd.f32 %v696, 1.0
    %v698 = vrcp.pop %v697
    %v699 = vmul.f32 %v697, %v698
    %v700 = vsub.f32 1.0, %v699
    %v701 = vmul.f32 %v698, %v700
    %v702 = vadd.f32 %v698, %v701
    %vm703 = vweird.f32 %v697
    %vm704 = vweird.f32 %v698
    %vm705 = vmor %vm703, %vm704
    %v706 = vsel %vm705, %v698, %v702
    %v707 = vand.u32 2147483647, %v697
    %vm708 = vcmp.eq.f32.partialorder %v707, 8.507059e+37
    %v709 = vand.u32 %v697, 2147483648
    %v710 = vor.u32 1.1754944e-38, %v709
    %v711 = vsel %vm708, %v710, %v706
    %v712 = vmul.f32 %v687, %v711
    %v713 = vmin.f32 %v712, 1.0
    %v714 = vmax.f32 %v713, -1.0
    %v715 = vadd.f32 %v674, 1.0
    %v716 = vadd.f32 %v714, 1.0
    %v717 = vmul.f32 %v631, %v715
    %v718 = vmul.f32 %v632, %v716
    %v719 = vadd.f32 %v717, %v453
    %v720 = vadd.f32 %v718, %v454
    %s721 = scalar_lea.vmem %s2, 96
    %v722 = vld [vmem:[%s721] sm:$0xff]
    %v723 = vld [vmem:[%s721 + $0x8] sm:$0xff]
    %v724 = vld [vmem:[%s721 + $0x10] sm:$0xff]
    %v725 = vld [vmem:[%s721 + $0x18] sm:$0xff]
    %v726 = vld [vmem:[%s5 + $0x4] sm:$0x1]
    %v727 = vperm.slane %v726, 0
    %v728 = vsel %vm32, %v575, 0
    %v730 = vsel %vm32, %v576, 0
    %732 = vmatpush.msra.mxu0 0.0
    %733 = vmatpush.msra.mxu0 0.0
    %734 = vmatpush.msra.mxu0 0.0
    %735 = vmatpush.msra.mxu0 0.0
    %736 = vmatpush.msra.mxu0 0.0
    %737 = vmatpush.msra.mxu0 0.0
    %738 = vmatpush.msra.mxu0 0.0
    %739 = vmatpush.msra.mxu0 0.0
    %740 = vmatpush.msra.mxu0 0.0
    %741 = vmatpush.msra.mxu0 0.0
    %742 = vmatpush.msra.mxu0 0.0
    %743 = vmatpush.msra.mxu0 0.0
    %744 = vmatpush.msra.mxu0 %v725
    %745 = vmatpush.msra.mxu0 %v724
    %746 = vmatpush.msra.mxu0 %v723
    %747 = vmatpush.msra.mxu0 %v722
    %748 = vmatmul.f32.gmra.mxu0 %v728
    %v749 = vpop.f32.mrf.mxu0
    %v750 = vadd.f32 %v727, %v749
    %751 = vmatmul.f32.gmra.mxu0 %v730
    %v752 = vpop.f32.mrf.mxu0
    %v753 = vadd.f32 %v727, %v752
    %754 = vdwg.mxu0
    %v755 = vmul.f32 %v750, 0.5
    %v756 = vmul.f32 %v753, 0.5
    %v757 = vmul.f32 %v750, 0.70710677
    %v758 = vmul.f32 %v753, 0.70710677
    %v759 = vmul.f32 %v757, %v757
    %v760 = vmin.f32 16.0, %v759
    %v761 = vmul.f32 %v760, 2.1237322e-06
    %v762 = vadd.f32 %v761, 0.00028619796
    %v763 = vmul.f32 %v760, %v762
    %v764 = vadd.f32 %v763, 0.0036580483
    %v765 = vmul.f32 %v760, %v764
    %v766 = vadd.f32 %v765, 0.05243302
    %v767 = vmul.f32 %v760, %v766
    %v768 = vadd.f32 %v767, 0.18741608
    %v769 = vmul.f32 %v760, %v768
    %v770 = vadd.f32 %v769, 1.1283791
    %v771 = vmul.f32 %v757, %v770
    %v772 = vmul.f32 %v760, 3.8918573e-05
    %v773 = vadd.f32 %v772, 0.001143296
    %v774 = vmul.f32 %v760, %v773
    %v775 = vadd.f32 %v774, 0.014752088
    %v776 = vmul.f32 %v760, %v775
    %v777 = vadd.f32 %v776, 0.112945676
    %v778 = vmul.f32 %v760, %v777
    %v779 = vadd.f32 %v778, 0.4994258
    %v780 = vmul.f32 %v760, %v779
    %v781 = vadd.f32 %v780, 1.0
    %v782 = vrcp.pop %v781
    %v783 = vmul.f32 %v781, %v782
    %v784 = vsub.f32 1.0, %v783
    %v785 = vmul.f32 %v782, %v784
    %v786 = vadd.f32 %v782, %v785
    %vm787 = vweird.f32 %v781
    %vm788 = vweird.f32 %v782
    %vm789 = vmor %vm787, %vm788
    %v790 = vsel %vm789, %v782, %v786
    %v791 = vand.u32 2147483647, %v781
    %vm792 = vcmp.eq.f32.partialorder %v791, 8.507059e+37
    %v793 = vand.u32 %v781, 2147483648
    %v794 = vor.u32 1.1754944e-38, %v793
    %v795 = vsel %vm792, %v794, %v790
    %v796 = vmul.f32 %v771, %v795
    %v797 = vmin.f32 %v796, 1.0
    %v798 = vmax.f32 %v797, -1.0
    %v799 = vmul.f32 %v758, %v758
    %v800 = vmin.f32 16.0, %v799
    %v801 = vmul.f32 %v800, 2.1237322e-06
    %v802 = vadd.f32 %v801, 0.00028619796
    %v803 = vmul.f32 %v800, %v802
    %v804 = vadd.f32 %v803, 0.0036580483
    %v805 = vmul.f32 %v800, %v804
    %v806 = vadd.f32 %v805, 0.05243302
    %v807 = vmul.f32 %v800, %v806
    %v808 = vadd.f32 %v807, 0.18741608
    %v809 = vmul.f32 %v800, %v808
    %v810 = vadd.f32 %v809, 1.1283791
    %v811 = vmul.f32 %v758, %v810
    %v812 = vmul.f32 %v800, 3.8918573e-05
    %v813 = vadd.f32 %v812, 0.001143296
    %v814 = vmul.f32 %v800, %v813
    %v815 = vadd.f32 %v814, 0.014752088
    %v816 = vmul.f32 %v800, %v815
    %v817 = vadd.f32 %v816, 0.112945676
    %v818 = vmul.f32 %v800, %v817
    %v819 = vadd.f32 %v818, 0.4994258
    %v820 = vmul.f32 %v800, %v819
    %v821 = vadd.f32 %v820, 1.0
    %v822 = vrcp.pop %v821
    %v823 = vmul.f32 %v821, %v822
    %v824 = vsub.f32 1.0, %v823
    %v825 = vmul.f32 %v822, %v824
    %v826 = vadd.f32 %v822, %v825
    %vm827 = vweird.f32 %v821
    %vm828 = vweird.f32 %v822
    %vm829 = vmor %vm827, %vm828
    %v830 = vsel %vm829, %v822, %v826
    %v831 = vand.u32 2147483647, %v821
    %vm832 = vcmp.eq.f32.partialorder %v831, 8.507059e+37
    %v833 = vand.u32 %v821, 2147483648
    %v834 = vor.u32 1.1754944e-38, %v833
    %v835 = vsel %vm832, %v834, %v830
    %v836 = vmul.f32 %v811, %v835
    %v837 = vmin.f32 %v836, 1.0
    %v838 = vmax.f32 %v837, -1.0
    %v839 = vadd.f32 %v798, 1.0
    %v840 = vadd.f32 %v838, 1.0
    %v841 = vmul.f32 %v755, %v839
    %v842 = vmul.f32 %v756, %v840
    %845 = vrot.lane.b32.xlu0 %v841, 64
    %v846 = vpop.permute.xlu0 %845
    %847 = vrot.lane.b32.xlu0 %v842, 64
    %v848 = vpop.permute.xlu0 %847
    %v851 = vsel %vm319, %v719, %v846
    %v852 = vsel %vm319, %v720, %v848
    %s853 = scalar_lea.vmem %s3, 288
    %v854 = vld [vmem:[%s853] sm:$0xff]
    %v855 = vld [vmem:[%s853 + $0x8] sm:$0xff]
    %v856 = vld [vmem:[%s853 + $0x10] sm:$0xff]
    %v857 = vld [vmem:[%s853 + $0x18] sm:$0xff]
    %v858 = vld [vmem:[%s853 + $0x20] sm:$0xff]
    %v859 = vld [vmem:[%s853 + $0x28] sm:$0xff]
    %v860 = vld [vmem:[%s853 + $0x30] sm:$0xff]
    %v861 = vld [vmem:[%s853 + $0x38] sm:$0xff]
    %v862 = vld [vmem:[%s853 + $0x40] sm:$0xff]
    %v863 = vld [vmem:[%s853 + $0x48] sm:$0xff]
    %v864 = vld [vmem:[%s853 + $0x50] sm:$0xff]
    %v865 = vld [vmem:[%s853 + $0x58] sm:$0xff]
    %v866 = vld [vmem:[%s5 + $0x7] sm:$0x1]
    %v867 = vperm.slane %v866, 0
    %v869 = vsel %vm337, %v851, 0
    %v872 = vsel %vm337, %v852, 0
    %874 = vmatpush.msra.mxu0 0.0
    %875 = vmatpush.msra.mxu0 0.0
    %876 = vmatpush.msra.mxu0 0.0
    %877 = vmatpush.msra.mxu0 0.0
    %878 = vmatpush.msra.mxu0 %v865
    %879 = vmatpush.msra.mxu0 %v864
    %880 = vmatpush.msra.mxu0 %v863
    %881 = vmatpush.msra.mxu0 %v862
    %882 = vmatpush.msra.mxu0 %v861
    %883 = vmatpush.msra.mxu0 %v860
    %884 = vmatpush.msra.mxu0 %v859
    %885 = vmatpush.msra.mxu0 %v858
    %886 = vmatpush.msra.mxu0 %v857
    %887 = vmatpush.msra.mxu0 %v856
    %888 = vmatpush.msra.mxu0 %v855
    %889 = vmatpush.msra.mxu0 %v854
    %890 = vmatmul.f32.gmra.mxu0 %v869
    %v891 = vpop.f32.mrf.mxu0
    %v892 = vadd.f32 %v867, %v891
    %893 = vmatmul.f32.gmra.mxu0 %v872
    %v894 = vpop.f32.mrf.mxu0
    %v895 = vadd.f32 %v867, %v894
    %896 = vdwg.mxu0
    %v897 = vmul.f32 %v892, 0.5
    %v898 = vmul.f32 %v895, 0.5
    %v899 = vmul.f32 %v892, 0.70710677
    %v900 = vmul.f32 %v895, 0.70710677
    %v901 = vmul.f32 %v899, %v899
    %v902 = vmin.f32 16.0, %v901
    %v903 = vmul.f32 %v902, 2.1237322e-06
    %v904 = vadd.f32 %v903, 0.00028619796
    %v905 = vmul.f32 %v902, %v904
    %v906 = vadd.f32 %v905, 0.0036580483
    %v907 = vmul.f32 %v902, %v906
    %v908 = vadd.f32 %v907, 0.05243302
    %v909 = vmul.f32 %v902, %v908
    %v910 = vadd.f32 %v909, 0.18741608
    %v911 = vmul.f32 %v902, %v910
    %v912 = vadd.f32 %v911, 1.1283791
    %v913 = vmul.f32 %v899, %v912
    %v914 = vmul.f32 %v902, 3.8918573e-05
    %v915 = vadd.f32 %v914, 0.001143296
    %v916 = vmul.f32 %v902, %v915
    %v917 = vadd.f32 %v916, 0.014752088
    %v918 = vmul.f32 %v902, %v917
    %v919 = vadd.f32 %v918, 0.112945676
    %v920 = vmul.f32 %v902, %v919
    %v921 = vadd.f32 %v920, 0.4994258
    %v922 = vmul.f32 %v902, %v921
    %v923 = vadd.f32 %v922, 1.0
    %v924 = vrcp.pop %v923
    %v925 = vmul.f32 %v923, %v924
    %v926 = vsub.f32 1.0, %v925
    %v927 = vmul.f32 %v924, %v926
    %v928 = vadd.f32 %v924, %v927
    %vm929 = vweird.f32 %v923
    %vm930 = vweird.f32 %v924
    %vm931 = vmor %vm929, %vm930
    %v932 = vsel %vm931, %v924, %v928
    %v933 = vand.u32 2147483647, %v923
    %vm934 = vcmp.eq.f32.partialorder %v933, 8.507059e+37
    %v935 = vand.u32 %v923, 2147483648
    %v936 = vor.u32 1.1754944e-38, %v935
    %v937 = vsel %vm934, %v936, %v932
    %v938 = vmul.f32 %v913, %v937
    %v939 = vmin.f32 %v938, 1.0
    %v940 = vmax.f32 %v939, -1.0
    %v941 = vmul.f32 %v900, %v900
    %v942 = vmin.f32 16.0, %v941
    %v943 = vmul.f32 %v942, 2.1237322e-06
    %v944 = vadd.f32 %v943, 0.00028619796
    %v945 = vmul.f32 %v942, %v944
    %v946 = vadd.f32 %v945, 0.0036580483
    %v947 = vmul.f32 %v942, %v946
    %v948 = vadd.f32 %v947, 0.05243302
    %v949 = vmul.f32 %v942, %v948
    %v950 = vadd.f32 %v949, 0.18741608
    %v951 = vmul.f32 %v942, %v950
    %v952 = vadd.f32 %v951, 1.1283791
    %v953 = vmul.f32 %v900, %v952
    %v954 = vmul.f32 %v942, 3.8918573e-05
    %v955 = vadd.f32 %v954, 0.001143296
    %v956 = vmul.f32 %v942, %v955
    %v957 = vadd.f32 %v956, 0.014752088
    %v958 = vmul.f32 %v942, %v957
    %v959 = vadd.f32 %v958, 0.112945676
    %v960 = vmul.f32 %v942, %v959
    %v961 = vadd.f32 %v960, 0.4994258
    %v962 = vmul.f32 %v942, %v961
    %v963 = vadd.f32 %v962, 1.0
    %v964 = vrcp.pop %v963
    %v965 = vmul.f32 %v963, %v964
    %v966 = vsub.f32 1.0, %v965
    %v967 = vmul.f32 %v964, %v966
    %v968 = vadd.f32 %v964, %v967
    %vm969 = vweird.f32 %v963
    %vm970 = vweird.f32 %v964
    %vm971 = vmor %vm969, %vm970
    %v972 = vsel %vm971, %v964, %v968
    %v973 = vand.u32 2147483647, %v963
    %vm974 = vcmp.eq.f32.partialorder %v973, 8.507059e+37
    %v975 = vand.u32 %v963, 2147483648
    %v976 = vor.u32 1.1754944e-38, %v975
    %v977 = vsel %vm974, %v976, %v972
    %v978 = vmul.f32 %v953, %v977
    %v979 = vmin.f32 %v978, 1.0
    %v980 = vmax.f32 %v979, -1.0
    %v981 = vadd.f32 %v940, 1.0
    %v982 = vadd.f32 %v980, 1.0
    %v983 = vmul.f32 %v897, %v981
    %v984 = vmul.f32 %v898, %v982
    %v985 = vld [vmem:[%s4] sm:$0xff]
    %v986 = vld [vmem:[%s4 + $0x8] sm:$0xff]
    %v987 = vld [vmem:[%s4 + $0x10] sm:$0xff]
    %v988 = vld [vmem:[%s4 + $0x18] sm:$0xff]
    %v989 = vld [vmem:[%s4 + $0x20] sm:$0xff]
    %v990 = vld [vmem:[%s4 + $0x28] sm:$0xff]
    %v991 = vld [vmem:[%s4 + $0x30] sm:$0xff]
    %v992 = vld [vmem:[%s4 + $0x38] sm:$0xff]
    %v993 = vld [vmem:[%s5 + $0x8] sm:$0x1]
    %v994 = vperm.slane %v993, 0
    %v996 = vsel %vm319, %v983, 0
    %v999 = vsel %vm319, %v984, 0
    %1001 = vmatpush.msra.mxu0 0.0
    %1002 = vmatpush.msra.mxu0 0.0
    %1003 = vmatpush.msra.mxu0 0.0
    %1004 = vmatpush.msra.mxu0 0.0
    %1005 = vmatpush.msra.mxu0 0.0
    %1006 = vmatpush.msra.mxu0 0.0
    %1007 = vmatpush.msra.mxu0 0.0
    %1008 = vmatpush.msra.mxu0 0.0
    %1009 = vmatpush.msra.mxu0 %v992
    %1010 = vmatpush.msra.mxu0 %v991
    %1011 = vmatpush.msra.mxu0 %v990
    %1012 = vmatpush.msra.mxu0 %v989
    %1013 = vmatpush.msra.mxu0 %v988
    %1014 = vmatpush.msra.mxu0 %v987
    %1015 = vmatpush.msra.mxu0 %v986
    %1016 = vmatpush.msra.mxu0 %v985
    %1017 = vmatmul.f32.gmra.mxu0 %v996
    %v1018 = vpop.f32.mrf.mxu0
    %v1019 = vadd.f32 %v994, %v1018
    %1020 = vmatmul.f32.gmra.mxu0 %v999
    %v1021 = vpop.f32.mrf.mxu0
    %v1022 = vadd.f32 %v994, %v1021
    %1023 = vdwg.mxu0
    %1024 = vst [vmem:[#allocation2] sm:$0xff] %v1019
    %1025 = vst [vmem:[#allocation2 + $0x8] sm:$0xff] %v1022
    // Predicated region
    $region26: #{tpu_custom_call.1} parent=1 // pred_check
      _
    $region27: #{tpu_custom_call.1} parent=1 // pred_check_branch
      %1027 = sbr.rel (0) target = $region29
    $region28: #{tpu_custom_call.1} parent=1 // pred_region
      %1029 = vsyncadd [#allocation3], 0
      %s1030 = sshll.u32 [#allocation2], 4
      %s1031 = int_to_ptr.vmem [resolvable:$true] %s1030
      %s1032 = sshll.u32 %s6, 4
      %s1033 = int_to_ptr.hbm [resolvable:$true] %s1032
      %1038 = dma.vmem_to_hbm [thread:$0]  %s1031, 256, %s1033, [#allocation3], 128, 128, 8
    $region29: #{tpu_custom_call.1} parent=1 // pred_fallthru
      _
    // Predicated region
    $region30: #{tpu_custom_call.1} parent=1 // pred_check
      _
    $region31: #{tpu_custom_call.1} parent=1 // pred_check_branch
      %1040 = sbr.rel (0) target = $region33
    $region32: #{tpu_custom_call.1} parent=1 // pred_region
      %1042 = dma.done [#allocation3], 256
    $region33: #{tpu_custom_call.1} parent=1 // pred_fallthru
      _
    %1043 = vsyncpa [#allocation3], 1

</llo_original>
